<compile_context>
chip_gen: v6e
topology: v6e:2x2x1
jax: 0.10.0
libtpu: 0.0.40
codegen_flags: <defaults>
</compile_context>

<pallas_src>
import functools

import jax
import jax.numpy as jnp
from jax import lax
from jax.experimental import pallas as pl
from jax.experimental.pallas import tpu as pltpu


# --------------------------------------------------------------------------------------
# Kernel 1: fused QKV projection (single 3-wide GEMM, scale pre-folded into Wq).
# --------------------------------------------------------------------------------------
def qkv_proj_kernel(x_ref, wqkv_ref, q_ref, k_ref, v_ref):
    # x_ref: (tile, d_in) f32 ; wqkv_ref: (d_in, 3*d_out) bf16 ; outputs: (tile, d_out) bf16
    x = x_ref[...].astype(jnp.bfloat16)          # in-kernel cast, hidden under the MXU
    qkv = jnp.dot(x, wqkv_ref[...], preferred_element_type=jnp.float32)
    d_out = q_ref.shape[-1]
    q_ref[...] = qkv[:, :d_out].astype(q_ref.dtype)
    k_ref[...] = qkv[:, d_out:2 * d_out].astype(k_ref.dtype)
    v_ref[...] = qkv[:, 2 * d_out:].astype(v_ref.dtype)


# --------------------------------------------------------------------------------------
# Kernel 2: tiled causal flash attention + fused output projection.
# --------------------------------------------------------------------------------------
def flash_attn_kernel(q_ref, k_ref, v_ref, wo_ref, bo_ref, o_ref,
                      m_scr, l_scr, acc_scr, *,
                      num_heads, head_dim, block_q, block_kv, q_per_kv):
    # q_ref: (block_q, d_out) bf16 (scale folded into Wq), k/v_ref: (block_kv, d_out) bf16
    # wo_ref: (d_out, d_out) bf16, bo_ref: (1, d_out) f32, o_ref: (block_q, d_out)
    # scratch: m/l (H, block_q, 1) f32; acc (block_q, d_out) f32 lane-dense.
    qi = pl.program_id(1)
    ki = pl.program_id(2)
    r = q_per_kv
    last_ki = (qi + 1) * r - 1        # last KV tile that intersects the causal range

    @pl.when(ki == 0)
    def _init():
        m_scr[...] = jnp.full(m_scr.shape, -jnp.inf, dtype=jnp.float32)
        l_scr[...] = jnp.zeros(l_scr.shape, dtype=jnp.float32)
        acc_scr[...] = jnp.zeros(acc_scr.shape, dtype=jnp.float32)

    def _attn_block(masked):
        q = q_ref[...]
        k = k_ref[...]
        v = v_ref[...]
        if masked:
            row = lax.broadcasted_iota(jnp.int32, (block_q, block_kv), 0) + qi * block_q
            col = lax.broadcasted_iota(jnp.int32, (block_q, block_kv), 1) + ki * block_kv
            bias = jnp.where(col > row, -jnp.inf, 0.0).astype(jnp.float32)

        for h in range(num_heads):    # num_heads small & static -> unrolled
            lo, hi = h * head_dim, (h + 1) * head_dim
            qh = q[:, lo:hi]          # (block_q, hd) bf16
            kh = k[:, lo:hi]          # (block_kv, hd) bf16
            vh = v[:, lo:hi]          # (block_kv, hd) bf16

            # Contract the head dim of both operands -> no explicit K transpose.
            s = lax.dot_general(qh, kh, (((1,), (1,)), ((), ())),
                                preferred_element_type=jnp.float32)
            if masked:
                s = s + bias          # (block_q, block_kv) f32, scale already in Q

            m_prev = m_scr[h]                                     # (block_q, 1)
            m_new = jnp.maximum(m_prev, jnp.max(s, axis=-1, keepdims=True))
            alpha = jnp.exp(m_prev - m_new)
            p = jnp.exp(s - m_new)                                # unnormalized probs, f32
            l_scr[h] = alpha * l_scr[h] + jnp.sum(p, axis=-1, keepdims=True)
            acc_scr[:, lo:hi] = alpha * acc_scr[:, lo:hi] + jnp.dot(
                p.astype(jnp.bfloat16), vh, preferred_element_type=jnp.float32)
            m_scr[h] = m_new

    # Fully below the diagonal: no mask construction / bias adds needed.
    @pl.when(ki < qi * r)
    def _compute_below():
        _attn_block(masked=False)

    # Diagonal-straddling tiles: need the causal bias.
    @pl.when((ki >= qi * r) & (ki <= last_ki))
    def _compute_diag():
        _attn_block(masked=True)

    # Tiles with ki > last_ki are skipped entirely (and their K/V DMA is elided
    # by the clamped index_map in the wrapper).

    @pl.when(ki == last_ki)
    def _finalize():
        # Deferred normalization (one approx EUP reciprocal per head/row), then a
        # single full-depth output-projection GEMM on the lane-dense context.
        ctx = jnp.concatenate(
            [acc_scr[:, h * head_dim:(h + 1) * head_dim]
             * pl.reciprocal(l_scr[h], approx=True)
             for h in range(num_heads)],
            axis=-1).astype(jnp.bfloat16)                         # (block_q, d_out)
        out = jnp.dot(ctx, wo_ref[...], preferred_element_type=jnp.float32)
        o_ref[...] = (out + bo_ref[...]).astype(o_ref.dtype)
    # TODO(synk): dropout on attention weights omitted (inference / eval-mode identity).


# --------------------------------------------------------------------------------------
# Wrapper
# --------------------------------------------------------------------------------------
def multi_head_attention(x, wq, wk, wv, wo, bo, *, num_heads,
                         block_q=None, block_kv=None):
    B, T, d_in = x.shape
    d_out = wq.shape[1]
    assert d_out % num_heads == 0
    head_dim = d_out // num_heads
    scale = 1.0 / (head_dim ** 0.5)

    # block_q <= 256 keeps the v7x 64 MiB/TC budget safe; raise towards 512 on v5e/v6e.
    if block_q is None:
        block_q = min(T, 256)
    if block_kv is None:
        block_kv = min(T, 128)
    block_kv = min(block_kv, block_q)
    assert T % block_q == 0 and T % block_kv == 0 and block_q % block_kv == 0
    nt_q = T // block_q
    nt_kv = T // block_kv
    r = block_q // block_kv            # q tiles are r kv-tiles tall

    out_dtype = x.dtype
    # Host-side weight prep (done once per call; pre-foldable in a real model):
    # fold 1/sqrt(hd) into Wq and fuse the three projection weights into one GEMM operand.
    wqkv = jnp.concatenate([wq * scale, wk, wv], axis=1).astype(jnp.bfloat16)
    wob = wo.astype(jnp.bfloat16)
    bo2 = bo.reshape(1, d_out).astype(jnp.float32)

    # ---- kernel 1: fused QKV projection -----------------------------------------------
    q, k, v = pl.pallas_call(
        qkv_proj_kernel,
        out_shape=(
            jax.ShapeDtypeStruct((B, T, d_out), jnp.bfloat16),
            jax.ShapeDtypeStruct((B, T, d_out), jnp.bfloat16),
            jax.ShapeDtypeStruct((B, T, d_out), jnp.bfloat16),
        ),
        grid_spec=pltpu.PrefetchScalarGridSpec(
            num_scalar_prefetch=0,
            grid=(B, nt_q),
            in_specs=[
                pl.BlockSpec((None, block_q, d_in), lambda b, t: (b, t, 0)),
                pl.BlockSpec((d_in, 3 * d_out), lambda b, t: (0, 0)),
            ],
            out_specs=[
                pl.BlockSpec((None, block_q, d_out), lambda b, t: (b, t, 0)),
                pl.BlockSpec((None, block_q, d_out), lambda b, t: (b, t, 0)),
                pl.BlockSpec((None, block_q, d_out), lambda b, t: (b, t, 0)),
            ],
        ),
        compiler_params=pltpu.CompilerParams(
            dimension_semantics=("parallel", "parallel"),
            vmem_limit_bytes=64 * 1024 * 1024),
    )(x, wqkv)

    # ---- kernel 2: tiled causal flash attention + fused output projection -------------
    # Clamp the K/V block index to the causal range: for ki > last causal tile the
    # index repeats, so Pallas elides the (otherwise wasted) K/V prefetch DMA.
    kv_index_map = lambda b, qi, ki: (b, jnp.minimum(ki, (qi + 1) * r - 1), 0)

    out = pl.pallas_call(
        functools.partial(flash_attn_kernel, num_heads=num_heads, head_dim=head_dim,
                          block_q=block_q, block_kv=block_kv, q_per_kv=r),
        out_shape=jax.ShapeDtypeStruct((B, T, d_out), out_dtype),
        grid_spec=pltpu.PrefetchScalarGridSpec(
            num_scalar_prefetch=0,
            grid=(B, nt_q, nt_kv),
            in_specs=[
                pl.BlockSpec((None, block_q, d_out), lambda b, qi, ki: (b, qi, 0)),
                pl.BlockSpec((None, block_kv, d_out), kv_index_map),
                pl.BlockSpec((None, block_kv, d_out), kv_index_map),
                pl.BlockSpec((d_out, d_out), lambda b, qi, ki: (0, 0)),
                pl.BlockSpec((1, d_out), lambda b, qi, ki: (0, 0)),
            ],
            out_specs=pl.BlockSpec((None, block_q, d_out),
                                   lambda b, qi, ki: (b, qi, 0)),
            scratch_shapes=[
                pltpu.VMEM((num_heads, block_q, 1), jnp.float32),   # running max m
                pltpu.VMEM((num_heads, block_q, 1), jnp.float32),   # running sum l
                pltpu.VMEM((block_q, d_out), jnp.float32),          # lane-dense ctx acc
            ],
        ),
        compiler_params=pltpu.CompilerParams(
            dimension_semantics=("parallel", "parallel", "arbitrary"),
            vmem_limit_bytes=64 * 1024 * 1024),
    )(q, k, v, wob, bo2)
    return out


# --------------------------------------------------------------------------------------
# Pure-JAX reference (matches the PyTorch module's math, eval mode).
# --------------------------------------------------------------------------------------
def mha_reference(x, wq, wk, wv, wo, bo, *, num_heads):
    B, T, d_in = x.shape
    d_out = wq.shape[1]
    hd = d_out // num_heads
    q = (x @ wq).reshape(B, T, num_heads, hd).transpose(0, 2, 1, 3)
    k = (x @ wk).reshape(B, T, num_heads, hd).transpose(0, 2, 1, 3)
    v = (x @ wv).reshape(B, T, num_heads, hd).transpose(0, 2, 1, 3)
    scores = jnp.einsum("bhqd,bhkd->bhqk", q, k)
    mask = jnp.triu(jnp.ones((T, T), bool), k=1)
    scores = jnp.where(mask, -jnp.inf, scores)
    w = jax.nn.softmax(scores / hd ** 0.5, axis=-1)
    ctx = jnp.einsum("bhqk,bhkd->bhqd", w, v).transpose(0, 2, 1, 3).reshape(B, T, d_out)
    return ctx @ wo + bo


if __name__ == "__main__":
    # Small deterministic config. d_out=128 keeps everything lane-dense; T=32 with
    # block_q=16 / block_kv=8 exercises skipped, unmasked-below-diagonal, and
    # masked diagonal-straddle paths plus the clamped K/V index_map.
    B, T, d_in, d_out, num_heads = 2, 32, 32, 128, 4
    key = jax.random.PRNGKey(0)
    kx, kq, kk, kv, ko, kb = jax.random.split(key, 6)

    x = jax.random.normal(kx, (B, T, d_in), dtype=jnp.float32)
    wq = jax.random.normal(kq, (d_in, d_out), dtype=jnp.float32) * 0.05
    wk = jax.random.normal(kk, (d_in, d_out), dtype=jnp.float32) * 0.05
    wv = jax.random.normal(kv, (d_in, d_out), dtype=jnp.float32) * 0.05
    wo = jax.random.normal(ko, (d_out, d_out), dtype=jnp.float32) * 0.05
    bo = jax.random.normal(kb, (d_out,), dtype=jnp.float32) * 0.05

    out = multi_head_attention(x, wq, wk, wv, wo, bo, num_heads=num_heads,
                               block_q=16, block_kv=8)
    out = jax.block_until_ready(out)

    ref = mha_reference(x, wq, wk, wv, wo, bo, num_heads=num_heads)
    assert out.shape == (B, T, d_out)
    # bf16 MXU inputs (f32 accumulation) + approx reciprocal vs a pure-f32 reference.
    assert jnp.allclose(out, ref, atol=2e-2, rtol=2e-2), "mismatch vs JAX reference"

    print("KERNEL_OK")
</pallas_src>

<mosaic_0001>
module attributes {stable_mosaic.version = 11 : i64} {
  func.func @qkv_proj_kernel(%arg0: i32, %arg1: i32, %arg2: memref<1x16x32xf32, #tpu.memory_space<vmem>>, %arg3: memref<32x384xbf16, #tpu.memory_space<vmem>>, %arg4: memref<1x16x128xbf16, #tpu.memory_space<vmem>>, %arg5: memref<1x16x128xbf16, #tpu.memory_space<vmem>>, %arg6: memref<1x16x128xbf16, #tpu.memory_space<vmem>>) attributes {dimension_semantics = [#tpu.dimension_semantics<parallel>, #tpu.dimension_semantics<parallel>], iteration_bounds = array<i64: 2, 2>, scalar_prefetch = 0 : i64, scratch_operands = 0 : i64, tpu.core_type = #tpu.core_type<tc>, window_params = [{transform_indices = @transform_0, window_bounds = array<i64: 1, 16, 32>}, {pipeline_mode = #tpu.pipeline_mode<synchronous>, transform_indices = @transform_1, window_bounds = array<i64: 32, 384>}, {transform_indices = @transform_2, window_bounds = array<i64: 1, 16, 128>}, {transform_indices = @transform_3, window_bounds = array<i64: 1, 16, 128>}, {transform_indices = @transform_4, window_bounds = array<i64: 1, 16, 128>}]} {
    %c0 = arith.constant 0 : index
    %c0_0 = arith.constant 0 : index
    %c0_1 = arith.constant 0 : index
    %0 = vector.load %arg2[%c0, %c0_0, %c0_1] : memref<1x16x32xf32, #tpu.memory_space<vmem>>, vector<1x16x32xf32>
    %1 = vector.shape_cast %0 : vector<1x16x32xf32> to vector<16x32xf32>
    %2 = arith.truncf %1 : vector<16x32xf32> to vector<16x32xbf16>
    %c0_2 = arith.constant 0 : index
    %c0_3 = arith.constant 0 : index
    %3 = vector.load %arg3[%c0_2, %c0_3] : memref<32x384xbf16, #tpu.memory_space<vmem>>, vector<32x384xbf16>
    %cst = arith.constant dense<0.000000e+00> : vector<16x384xf32>
    %4 = tpu.matmul %2, %3, %cst {dimension_numbers = #tpu.dot_dimension_numbers<[1], [0], [0], [1], [0, 0, 1, 1], [], []>} : vector<16x32xbf16>, vector<32x384xbf16>, vector<16x384xf32> -> vector<16x384xf32>
    %5 = vector.extract_strided_slice %4 {offsets = [0, 0], sizes = [16, 128], strides = [1, 1]} : vector<16x384xf32> to vector<16x128xf32>
    %6 = arith.truncf %5 : vector<16x128xf32> to vector<16x128xbf16>
    %c0_4 = arith.constant 0 : index
    %c0_5 = arith.constant 0 : index
    %c0_6 = arith.constant 0 : index
    %7 = vector.load %arg4[%c0_4, %c0_5, %c0_6] : memref<1x16x128xbf16, #tpu.memory_space<vmem>>, vector<1x16x128xbf16>
    %8 = vector.shape_cast %7 : vector<1x16x128xbf16> to vector<16x128xbf16>
    %9 = vector.shape_cast %6 : vector<16x128xbf16> to vector<1x16x128xbf16>
    tpu.vector_store %arg4[%c0_4, %c0_5, %c0_6], %9 {strides = array<i32>} : memref<1x16x128xbf16, #tpu.memory_space<vmem>>, vector<1x16x128xbf16>,
    %10 = vector.extract_strided_slice %4 {offsets = [0, 128], sizes = [16, 128], strides = [1, 1]} : vector<16x384xf32> to vector<16x128xf32>
    %11 = arith.truncf %10 : vector<16x128xf32> to vector<16x128xbf16>
    %c0_7 = arith.constant 0 : index
    %c0_8 = arith.constant 0 : index
    %c0_9 = arith.constant 0 : index
    %12 = vector.load %arg5[%c0_7, %c0_8, %c0_9] : memref<1x16x128xbf16, #tpu.memory_space<vmem>>, vector<1x16x128xbf16>
    %13 = vector.shape_cast %12 : vector<1x16x128xbf16> to vector<16x128xbf16>
    %14 = vector.shape_cast %11 : vector<16x128xbf16> to vector<1x16x128xbf16>
    tpu.vector_store %arg5[%c0_7, %c0_8, %c0_9], %14 {strides = array<i32>} : memref<1x16x128xbf16, #tpu.memory_space<vmem>>, vector<1x16x128xbf16>,
    %15 = vector.extract_strided_slice %4 {offsets = [0, 256], sizes = [16, 128], strides = [1, 1]} : vector<16x384xf32> to vector<16x128xf32>
    %16 = arith.truncf %15 : vector<16x128xf32> to vector<16x128xbf16>
    %c0_10 = arith.constant 0 : index
    %c0_11 = arith.constant 0 : index
    %c0_12 = arith.constant 0 : index
    %17 = vector.load %arg6[%c0_10, %c0_11, %c0_12] : memref<1x16x128xbf16, #tpu.memory_space<vmem>>, vector<1x16x128xbf16>
    %18 = vector.shape_cast %17 : vector<1x16x128xbf16> to vector<16x128xbf16>
    %19 = vector.shape_cast %16 : vector<16x128xbf16> to vector<1x16x128xbf16>
    tpu.vector_store %arg6[%c0_10, %c0_11, %c0_12], %19 {strides = array<i32>} : memref<1x16x128xbf16, #tpu.memory_space<vmem>>, vector<1x16x128xbf16>,
    return
  }
  func.func @transform_0(%arg0: i32, %arg1: i32) -> (i32, i32, i32) {
    %c0_i32 = arith.constant 0 : i32
    %c0_i32_0 = arith.constant 0 : i32
    return %arg0, %arg1, %c0_i32 : i32, i32, i32
  }
  func.func @transform_1(%arg0: i32, %arg1: i32) -> (i32, i32) {
    %c0_i32 = arith.constant 0 : i32
    %c0_i32_0 = arith.constant 0 : i32
    %c0_i32_1 = arith.constant 0 : i32
    return %c0_i32, %c0_i32_0 : i32, i32
  }
  func.func @transform_2(%arg0: i32, %arg1: i32) -> (i32, i32, i32) {
    %c0_i32 = arith.constant 0 : i32
    %c0_i32_0 = arith.constant 0 : i32
    return %arg0, %arg1, %c0_i32 : i32, i32, i32
  }
  func.func @transform_3(%arg0: i32, %arg1: i32) -> (i32, i32, i32) {
    %c0_i32 = arith.constant 0 : i32
    %c0_i32_0 = arith.constant 0 : i32
    return %arg0, %arg1, %c0_i32 : i32, i32, i32
  }
  func.func @transform_4(%arg0: i32, %arg1: i32) -> (i32, i32, i32) {
    %c0_i32 = arith.constant 0 : i32
    %c0_i32_0 = arith.constant 0 : i32
    return %arg0, %arg1, %c0_i32 : i32, i32, i32
  }
}

</mosaic_0001>

<llo_original>
// kernel: tpu_custom_call.1
$region0: #{tpu_custom_call.1}
  #allocation0 [shape = 'u32[]', space=smem, size = 0x4, offset = 0x4, fixed_abs, tag = 'smem constant byte address 0x4 - core index']
  #allocation1 [shape = 'u32[144,128]{1,0:T(1,128)}', space=vmem, size = 0x12000, scoped, tag = 'internal scratch']
  %s0 = inlined_call_operand.hbm [shape: f32[2,32,32], index: 0, kind: input, shape index: {}]
  %s1 = inlined_call_operand.hbm [shape: bf16[32,384], index: 1, kind: input, shape index: {}]
  %s2 = inlined_call_operand.hbm [shape: bf16[2,32,128], index: 2, kind: output, shape index: {0}]
  %s3 = inlined_call_operand.hbm [shape: bf16[2,32,128], index: 3, kind: output, shape index: {1}]
  %s4 = inlined_call_operand.hbm [shape: bf16[2,32,128], index: 4, kind: output, shape index: {2}]
  %5 = xla_tuple %s2, %s3, %s4
  %s6 = sld [smem:[#allocation0]]
  $region65: #{tpu_custom_call.1} parent=0
    _
  %s8 = ssub.s32 1, %s6
  %s9 = scalar_select 0, %s8, %s6
  $region1: #{tpu_custom_call.1} parent=0
    #allocation2 [shape = 'u8[16384]{0}', space=vmem, size = 0x4000, scoped, tag = 'input window, operand 0']
    #allocation3 [shape = 's32[2]{0}', space=sflag, size = 0x8, scoped, tag = 'scoped memory for tpu_custom_call.1']
    #allocation4 [shape = 's32[2]{0}', space=sflag, size = 0x8, scoped, tag = 'scoped memory for tpu_custom_call.1']
    #allocation5 [shape = 'u8[24576]{0}', space=vmem, size = 0x6000, scoped, tag = 'input window, operand 1, single buffered']
    #allocation6 [shape = 's32[1]{0}', space=sflag, size = 0x4, scoped, tag = 'scoped memory for tpu_custom_call.1']
    #allocation7 [shape = 'u8[8192]{0}', space=vmem, size = 0x2000, scoped, tag = 'output window, operand 0']
    #allocation8 [shape = 'u8[8192]{0}', space=vmem, size = 0x2000, scoped, tag = 'output window, operand 1']
    #allocation9 [shape = 's32[2]{0}', space=sflag, size = 0x8, scoped, tag = 'scoped memory for tpu_custom_call.1']
    #allocation10 [shape = 'u8[8192]{0}', space=vmem, size = 0x2000, scoped, tag = 'output window, operand 2']
    %10 = vsyncpa [#allocation3], 0
    %s11 = scalar_lea.sflag [#allocation3], 1
    %12 = vsyncpa %s11, 0
    %13 = vsyncpa [#allocation6], 0
    %14 = vsyncpa [#allocation4], 0
    %s15 = scalar_lea.sflag [#allocation4], 1
    %16 = vsyncpa %s15, 0
    %17 = vsyncpa [#allocation9], 0
    %s18 = scalar_lea.sflag [#allocation9], 1
    %19 = vsyncpa %s18, 0
    loop: start=0, step=1, limit=6
    $region2: #{tpu_custom_call.1} parent=1 // loop_pre_header
      _
    $region3: #{tpu_custom_call.1} parent=1 // loop_header
      %s21 = sphi 0, %s25
      %p22 = scmp.ge.s32.totalorder %s21, 6
      %s28 = sphi 0, %s40
      %s29 = sphi 0, %s36
      %s30 = sphi 0, %s28
      %s31 = sphi 0, %s29
      %s32 = sphi 0, %s30
      %s33 = sphi 0, %s31
      %s45 = sphi 0, %s47
      %s48 = sphi 0, %s45
      %s49 = sphi 0, %s48
      %s65 = sphi 0, %s49
      %s69 = sphi 0, %s69
      %s71 = sphi 0, %s69
      %s72 = sphi 0, %s71
      %s86 = sphi 0, %s72
      %s94 = sphi 0, %s96
      %s97 = sphi 0, %s94
      %s98 = sphi 0, %s97
      %s114 = sphi 0, %s98
      %s122 = sphi 0, %s124
      %s125 = sphi 0, %s122
      %s126 = sphi 0, %s125
      %s142 = sphi 0, %s126
      %s150 = sphi 0, %s152
      %s153 = sphi 0, %s150
      %s154 = sphi 0, %s153
      %s170 = sphi 0, %s154
    $region4: #{tpu_custom_call.1} parent=1 // loop_header_branch
      %24 = sbr.rel (%p22) target = $region8
    $region5: #{tpu_custom_call.1} parent=1 // loop_body
      %s26 = ssub.s32 %s21, 1
      %s27 = ssub.s32 %s21, 2
      %s34 = sadd.s32 1, %s29
      %p35 = scmp.ge.s32.totalorder %s34, 2
      %s36 = scalar_select %p35, 0, %s34
      %s37 = sadd.s32 1, %s28
      %s38 = scalar_select %p35, %s37, %s28
      %p39 = scmp.ge.s32.totalorder %s38, 2
      %s40 = scalar_select %p39, 0, %s38
      %s41 = ssub.s32 %s28, %s40
      %s42 = ssub.s32 %s29, %s36
      %s43 = sor.u32 %s41, %s42
      %p44 = scmp.eq.s32.totalorder %s43, 0
      %s46 = sadd.s32 %s45, 1
      %s47 = scalar_select %p44, %s45, %s46
      %p50 = pneg %p44
      %p51 = scmp.eq.s32.totalorder %s21, 3
      %p52 = por %p50, %p51
      %p53 = scmp.ne.s32.totalorder %s45, %s48
      %p54 = scmp.eq.s32.totalorder %s21, 0
      %p55 = por %p53, %p54
      %p56 = scmp.ne.s32.totalorder %s45, %s48
      %p57 = scmp.eq.s32.totalorder %s26, 3
      %p58 = por %p56, %p57
      %p59 = scmp.ne.s32.totalorder %s48, %s49
      %p60 = scmp.eq.s32.totalorder %s26, 0
      %p61 = por %p59, %p60
      %p62 = scmp.ne.s32.totalorder %s48, %s49
      %p63 = scmp.eq.s32.totalorder %s27, 3
      %p64 = por %p62, %p63
      %p66 = scmp.ne.s32.totalorder %s49, %s65
      %p67 = scmp.eq.s32.totalorder %s27, 0
      %p68 = por %p66, %p67
      %s70 = sadd.s32 %s69, 1
      %p73 = scmp.eq.s32.totalorder %s21, 3
      %p74 = scmp.ne.s32.totalorder %s69, %s71
      %p75 = scmp.eq.s32.totalorder %s21, 0
      %p76 = por %p74, %p75
      %p77 = scmp.ne.s32.totalorder %s69, %s71
      %p78 = scmp.eq.s32.totalorder %s26, 3
      %p79 = por %p77, %p78
      %p80 = scmp.ne.s32.totalorder %s71, %s72
      %p81 = scmp.eq.s32.totalorder %s26, 0
      %p82 = por %p80, %p81
      %p83 = scmp.ne.s32.totalorder %s71, %s72
      %p84 = scmp.eq.s32.totalorder %s27, 3
      %p85 = por %p83, %p84
      %p87 = scmp.ne.s32.totalorder %s72, %s86
      %p88 = scmp.eq.s32.totalorder %s27, 0
      %p89 = por %p87, %p88
      %s90 = ssub.s32 %s28, %s40
      %s91 = ssub.s32 %s29, %s36
      %s92 = sor.u32 %s90, %s91
      %p93 = scmp.eq.s32.totalorder %s92, 0
      %s95 = sadd.s32 %s94, 1
      %s96 = scalar_select %p93, %s94, %s95
      %p99 = pneg %p93
      %p100 = scmp.eq.s32.totalorder %s21, 3
      %p101 = por %p99, %p100
      %p102 = scmp.ne.s32.totalorder %s94, %s97
      %p103 = scmp.eq.s32.totalorder %s21, 0
      %p104 = por %p102, %p103
      %p105 = scmp.ne.s32.totalorder %s94, %s97
      %p106 = scmp.eq.s32.totalorder %s26, 3
      %p107 = por %p105, %p106
      %p108 = scmp.ne.s32.totalorder %s97, %s98
      %p109 = scmp.eq.s32.totalorder %s26, 0
      %p110 = por %p108, %p109
      %p111 = scmp.ne.s32.totalorder %s97, %s98
      %p112 = scmp.eq.s32.totalorder %s27, 3
      %p113 = por %p111, %p112
      %p115 = scmp.ne.s32.totalorder %s98, %s114
      %p116 = scmp.eq.s32.totalorder %s27, 0
      %p117 = por %p115, %p116
      %s118 = ssub.s32 %s28, %s40
      %s119 = ssub.s32 %s29, %s36
      %s120 = sor.u32 %s118, %s119
      %p121 = scmp.eq.s32.totalorder %s120, 0
      %s123 = sadd.s32 %s122, 1
      %s124 = scalar_select %p121, %s122, %s123
      %p127 = pneg %p121
      %p128 = scmp.eq.s32.totalorder %s21, 3
      %p129 = por %p127, %p128
      %p130 = scmp.ne.s32.totalorder %s122, %s125
      %p131 = scmp.eq.s32.totalorder %s21, 0
      %p132 = por %p130, %p131
      %p133 = scmp.ne.s32.totalorder %s122, %s125
      %p134 = scmp.eq.s32.totalorder %s26, 3
      %p135 = por %p133, %p134
      %p136 = scmp.ne.s32.totalorder %s125, %s126
      %p137 = scmp.eq.s32.totalorder %s26, 0
      %p138 = por %p136, %p137
      %p139 = scmp.ne.s32.totalorder %s125, %s126
      %p140 = scmp.eq.s32.totalorder %s27, 3
      %p141 = por %p139, %p140
      %p143 = scmp.ne.s32.totalorder %s126, %s142
      %p144 = scmp.eq.s32.totalorder %s27, 0
      %p145 = por %p143, %p144
      %s146 = ssub.s32 %s28, %s40
      %s147 = ssub.s32 %s29, %s36
      %s148 = sor.u32 %s146, %s147
      %p149 = scmp.eq.s32.totalorder %s148, 0
      %s151 = sadd.s32 %s150, 1
      %s152 = scalar_select %p149, %s150, %s151
      %p155 = pneg %p149
      %p156 = scmp.eq.s32.totalorder %s21, 3
      %p157 = por %p155, %p156
      %p158 = scmp.ne.s32.totalorder %s150, %s153
      %p159 = scmp.eq.s32.totalorder %s21, 0
      %p160 = por %p158, %p159
      %p161 = scmp.ne.s32.totalorder %s150, %s153
      %p162 = scmp.eq.s32.totalorder %s26, 3
      %p163 = por %p161, %p162
      %p164 = scmp.ne.s32.totalorder %s153, %s154
      %p165 = scmp.eq.s32.totalorder %s26, 0
      %p166 = por %p164, %p165
      %p167 = scmp.ne.s32.totalorder %s153, %s154
      %p168 = scmp.eq.s32.totalorder %s27, 3
      %p169 = por %p167, %p168
      %p171 = scmp.ne.s32.totalorder %s154, %s170
      %p172 = scmp.eq.s32.totalorder %s27, 0
      %p173 = por %p171, %p172
      %p174 = scmp.le.s32.totalorder 1, %s21
      %p175 = scmp.lt.s32.totalorder %s21, 5
      %p176 = pnand %p174, %p175
      %p177 = pneg %p176
      // Predicated region
      $region9: #{tpu_custom_call.1} parent=5 // pred_check
        _
      $region10: #{tpu_custom_call.1} parent=5 // pred_check_branch
        %179 = sbr.rel (%p176) target = $region12
      $region11: #{tpu_custom_call.1} parent=5 // pred_region
        %s180 = ssub.s32 %s21, 1
        // Predicated region
        $region13: #{tpu_custom_call.1} parent=11 // pred_check
          %p181 = pneg %p82
        $region14: #{tpu_custom_call.1} parent=11 // pred_check_branch
          %183 = sbr.rel (%p181) target = $region16
        $region15: #{tpu_custom_call.1} parent=11 // pred_region
          %s185 = ssub.s32 768, 768
          %186 = vsyncadd [#allocation6], %s185
          %s187 = sshll.u32 [#allocation5], 4
          %s188 = int_to_ptr.vmem [resolvable:$true] %s187
          %193 = dma.hbm_to_vmem [thread:$0]  %s1, 768, %s188, [#allocation6], 192, 192, 12
        $region16: #{tpu_custom_call.1} parent=11 // pred_fallthru
          _
      $region12: #{tpu_custom_call.1} parent=5 // pred_fallthru
        _
      %p194 = scmp.lt.s32.totalorder %s21, 4
      // Predicated region
      $region17: #{tpu_custom_call.1} parent=5 // pred_check
        %p195 = pneg %p194
      $region18: #{tpu_custom_call.1} parent=5 // pred_check_branch
        %197 = sbr.rel (%p195) target = $region20
      $region19: #{tpu_custom_call.1} parent=5 // pred_region
        // Predicated region
        $region21: #{tpu_custom_call.1} parent=19 // pred_check
          %p198 = pneg %p55
        $region22: #{tpu_custom_call.1} parent=19 // pred_check_branch
          %200 = sbr.rel (%p198) target = $region24
        $region23: #{tpu_custom_call.1} parent=19 // pred_region
          %s201 = sand.u32 %s45, 1
          %s202 = scalar_lea.sflag [#allocation3], %s201
          %s203 = sand.u32 %s45, 1
          %s204 = smul.addr %s203, 16
          %s205 = scalar_lea.vmem [#allocation2], %s204
          %s206 = smul.u32 2, %s29
          %s208 = ssub.s32 256, 256
          %209 = vsyncadd %s202, %s208
          %s210 = smul.addr %s28, 4
          %s211 = sadd.s32 %s206, %s210
          %s212 = smul.addr %s211, 128
          %s213 = scalar_lea.hbm %s0, %s212
          %s214 = sshll.u32 %s205, 4
          %s215 = int_to_ptr.vmem [resolvable:$true] %s214
          %220 = dma.hbm_to_vmem [thread:$0]  %s213, 256, %s215, %s202, 128, 128, 8
        $region24: #{tpu_custom_call.1} parent=19 // pred_fallthru
          _
      $region20: #{tpu_custom_call.1} parent=5 // pred_fallthru
        _
      %p221 = scmp.le.s32.totalorder 1, %s21
      %p222 = scmp.lt.s32.totalorder %s21, 5
      %p223 = pnand %p221, %p222
      %p224 = pneg %p223
      // Predicated region
      $region25: #{tpu_custom_call.1} parent=5 // pred_check
        _
      $region26: #{tpu_custom_call.1} parent=5 // pred_check_branch
        %226 = sbr.rel (%p223) target = $region28
      $region27: #{tpu_custom_call.1} parent=5 // pred_region
        %s227 = ssub.s32 %s21, 1
        %s228 = sand.u32 %s48, 1
        %s229 = scalar_lea.sflag [#allocation3], %s228
        %s230 = sand.u32 %s48, 1
        %s231 = smul.addr %s230, 16
        %s232 = scalar_lea.vmem [#allocation2], %s231
        // Predicated region
        $region29: #{tpu_custom_call.1} parent=27 // pred_check
          %p233 = pneg %p61
        $region30: #{tpu_custom_call.1} parent=27 // pred_check_branch
          %235 = sbr.rel (%p233) target = $region32
        $region31: #{tpu_custom_call.1} parent=27 // pred_region
          %236 = dma.done %s229, 256
        $region32: #{tpu_custom_call.1} parent=27 // pred_fallthru
          _
        // Predicated region
        $region33: #{tpu_custom_call.1} parent=27 // pred_check
          %p237 = pneg %p82
        $region34: #{tpu_custom_call.1} parent=27 // pred_check_branch
          %239 = sbr.rel (%p237) target = $region36
        $region35: #{tpu_custom_call.1} parent=27 // pred_region
          %240 = dma.done [#allocation6], 768
        $region36: #{tpu_custom_call.1} parent=27 // pred_fallthru
          _
        %s241 = sand.u32 %s48, 1
        %s242 = scalar_lea.sflag [#allocation3], %s241
        %s243 = sand.u32 %s48, 1
        %s244 = smul.addr %s243, 16
        %s245 = scalar_lea.vmem [#allocation2], %s244
        %p246 = pneg %p61
        %p247 = pneg %p58
        %p248 = pneg %p82
        %p249 = pneg %p79
        %p250 = pneg %p110
        %p251 = pneg %p107
        %s252 = sand.u32 %s97, 1
        %s253 = scalar_lea.sflag [#allocation4], %s252
        %s254 = sand.u32 %s97, 1
        %s255 = smul.addr %s254, 8
        %s256 = scalar_lea.vmem [#allocation7], %s255
        %p257 = pneg %p138
        %p258 = pneg %p135
        %s259 = sand.u32 %s26, 1
        %s260 = scalar_lea.sflag [#allocation9], %s259
        %s261 = sand.u32 %s125, 1
        %s262 = smul.addr %s261, 8
        %s263 = scalar_lea.vmem [#allocation8], %s262
        %p264 = pneg %p166
        %p265 = pneg %p163
        %s266 = sand.u32 %s26, 1
        %s267 = scalar_lea.sflag [#allocation9], %s266
        %s268 = sand.u32 %s153, 1
        %s269 = smul.addr %s268, 8
        %s270 = scalar_lea.vmem [#allocation10], %s269
        %s271 = smul.u32 2, %s31
        %s272 = smul.u32 2, %s31
        %s273 = smul.u32 2, %s31
        %s274 = smul.u32 2, %s31
        %v276 = vld [vmem:[%s232] sm:$0xff]
        %v277 = vld [vmem:[%s232 + $0x8] sm:$0xff]
        %v278 = vpack.c.bf16 %v277, %v276
        %v279 = vld [vmem:[#allocation5] sm:$0xff]
        %v280 = vld [vmem:[#allocation5 + $0x8] sm:$0xf]
        %v281 = vld [vmem:[#allocation5 + $0xc] sm:$0xff]
        %v282 = vld [vmem:[#allocation5 + $0x14] sm:$0xf]
        %v283 = vld [vmem:[#allocation5 + $0x18] sm:$0xff]
        %v284 = vld [vmem:[#allocation5 + $0x20] sm:$0xf]
        %v285 = vld [vmem:[#allocation5 + $0x24] sm:$0xff]
        %v286 = vld [vmem:[#allocation5 + $0x2c] sm:$0xf]
        %v295 = vunpack.c.l.b16 %v279
        %v296 = vunpack.c.h.b16 %v279
        %v297 = vunpack.c.l.b16 %v280
        %v298 = vunpack.c.l.b16 %v281
        %v299 = vunpack.c.h.b16 %v281
        %v300 = vunpack.c.l.b16 %v282
        %v301 = vunpack.c.l.b16 %v283
        %v302 = vunpack.c.h.b16 %v283
        %v303 = vunpack.c.l.b16 %v284
        %v304 = vunpack.c.l.b16 %v285
        %v305 = vunpack.c.h.b16 %v285
        %v306 = vunpack.c.l.b16 %v286
        %v307 = vpack.c.b16 %v298, %v295
        %v308 = vpack.c.b16 %v299, %v296
        %v309 = vpack.c.b16 %v300, %v297
        %v310 = vpack.c.b16 %v304, %v301
        %v311 = vpack.c.b16 %v305, %v302
        %v312 = vpack.c.b16 %v306, %v303
        %vm319 = vcmask 261120
        %v321 = vsel %vm319, %v278, 0
        %323 = vmatprep.subr.bf16.mxu0 0
        %324 = vmatpush1.bf16.msra.mxu0 0
        %325 = vmatprep.subr.bf16.mxu0 0
        %326 = vmatpush1.bf16.msra.mxu0 0
        %327 = vmatprep.subr.bf16.mxu0 0
        %328 = vmatpush1.bf16.msra.mxu0 0
        %329 = vmatprep.subr.bf16.mxu0 0
        %330 = vmatpush1.bf16.msra.mxu0 0
        %331 = vmatprep.subr.bf16.mxu0 0
        %332 = vmatpush1.bf16.msra.mxu0 0
        %333 = vmatprep.subr.bf16.mxu0 0
        %334 = vmatpush1.bf16.msra.mxu0 0
        %335 = vmatprep.subr.bf16.mxu0 %v311
        %336 = vmatpush1.bf16.msra.mxu0 %v310
        %337 = vmatprep.subr.bf16.mxu0 %v308
        %338 = vmatpush1.bf16.msra.mxu0 %v307
        %339 = vmatprep.subr.bf16.mxu0 0
        %340 = vmatpush2.bf16.msra.mxu0 0
        %341 = vmatprep.subr.bf16.mxu0 0
        %342 = vmatpush2.bf16.msra.mxu0 0
        %343 = vmatprep.subr.bf16.mxu0 0
        %344 = vmatpush2.bf16.msra.mxu0 0
        %345 = vmatprep.subr.bf16.mxu0 0
        %346 = vmatpush2.bf16.msra.mxu0 0
        %347 = vmatprep.subr.bf16.mxu0 0
        %348 = vmatpush2.bf16.msra.mxu0 0
        %349 = vmatprep.subr.bf16.mxu0 0
        %350 = vmatpush2.bf16.msra.mxu0 0
        %351 = vmatprep.subr.bf16.mxu0 0
        %352 = vmatpush2.bf16.msra.mxu0 0
        %353 = vmatprep.subr.bf16.mxu0 0
        %354 = vmatpush2.bf16.msra.mxu0 0
        %355 = vmatprep.mubr.bf16.mxu0 0
        %356 = vmatmul.mubr.bf16.gmra.mxu0 %v321
        %v357 = vpop.f32.mrf.mxu0
        %v358 = vadd.f32 0.0, %v357
        %v359 = vpop.f32.mrf.mxu0
        %v360 = vadd.f32 0.0, %v359
        %v361 = vpop.f32.mrf.mxu0
        %v362 = vadd.f32 0.0, %v361
        %v363 = vpop.f32.mrf.mxu0
        %v364 = vadd.f32 0.0, %v363
        %365 = vdwg.mxu0
        %366 = vmatprep.subr.bf16.mxu0 0
        %367 = vmatpush1.bf16.msra.mxu0 0
        %368 = vmatprep.subr.bf16.mxu0 0
        %369 = vmatpush1.bf16.msra.mxu0 0
        %370 = vmatprep.subr.bf16.mxu0 0
        %371 = vmatpush1.bf16.msra.mxu0 0
        %372 = vmatprep.subr.bf16.mxu0 0
        %373 = vmatpush1.bf16.msra.mxu0 0
        %374 = vmatprep.subr.bf16.mxu0 0
        %375 = vmatpush1.bf16.msra.mxu0 0
        %376 = vmatprep.subr.bf16.mxu0 0
        %377 = vmatpush1.bf16.msra.mxu0 0
        %378 = vmatprep.subr.bf16.mxu0 0
        %379 = vmatpush1.bf16.msra.mxu0 %v312
        %380 = vmatprep.subr.bf16.mxu0 0
        %381 = vmatpush1.bf16.msra.mxu0 %v309
        %382 = vmatprep.subr.bf16.mxu0 0
        %383 = vmatpush2.bf16.msra.mxu0 0
        %384 = vmatprep.subr.bf16.mxu0 0
        %385 = vmatpush2.bf16.msra.mxu0 0
        %386 = vmatprep.subr.bf16.mxu0 0
        %387 = vmatpush2.bf16.msra.mxu0 0
        %388 = vmatprep.subr.bf16.mxu0 0
        %389 = vmatpush2.bf16.msra.mxu0 0
        %390 = vmatprep.subr.bf16.mxu0 0
        %391 = vmatpush2.bf16.msra.mxu0 0
        %392 = vmatprep.subr.bf16.mxu0 0
        %393 = vmatpush2.bf16.msra.mxu0 0
        %394 = vmatprep.subr.bf16.mxu0 0
        %395 = vmatpush2.bf16.msra.mxu0 0
        %396 = vmatprep.subr.bf16.mxu0 0
        %397 = vmatpush2.bf16.msra.mxu0 0
        %398 = vmatprep.mubr.bf16.mxu0 0
        %399 = vmatmul.mubr.bf16.gmra.mxu0 %v321
        %v400 = vpop.f32.mrf.mxu0
        %v401 = vadd.f32 0.0, %v400
        %v402 = vpop.f32.mrf.mxu0
        %v403 = vpop.f32.mrf.mxu0
        %v404 = vadd.f32 0.0, %v403
        %v405 = vpop.f32.mrf.mxu0
        %406 = vdwg.mxu0
        %v407 = vpack.c.bf16 %v362, %v358
        %v409 = vunpack.c.l.b16 %v407
        %v410 = vunpack.c.h.b16 %v407
        %v411 = vpack.c.b16 %v409, %v409
        %v412 = vpack.c.b16 %v410, %v410
        %415 = vst [vmem:[%s256] sm:$0xf] %v411
        %416 = vst [vmem:[%s256 + $0x4] sm:$0xf] %v412
        %v417 = vpack.c.bf16 %v364, %v360
        %v419 = vunpack.c.l.b16 %v417
        %v420 = vunpack.c.h.b16 %v417
        %v421 = vpack.c.b16 %v419, %v419
        %v422 = vpack.c.b16 %v420, %v420
        %425 = vst [vmem:[%s263] sm:$0xf] %v421
        %426 = vst [vmem:[%s263 + $0x4] sm:$0xf] %v422
        %v427 = vpack.c.bf16 %v404, %v401
        %v429 = vunpack.c.l.b16 %v427
        %v430 = vunpack.c.h.b16 %v427
        %v431 = vpack.c.b16 %v429, %v429
        %v432 = vpack.c.b16 %v430, %v430
        %435 = vst [vmem:[%s270] sm:$0xf] %v431
        %436 = vst [vmem:[%s270 + $0x4] sm:$0xf] %v432
        %s437 = sand.u32 %s97, 1
        %s438 = scalar_lea.sflag [#allocation4], %s437
        %s439 = sand.u32 %s97, 1
        %s440 = smul.addr %s439, 8
        %s441 = scalar_lea.vmem [#allocation7], %s440
        %s442 = sand.u32 %s26, 1
        %s443 = scalar_lea.sflag [#allocation9], %s442
        %s444 = sand.u32 %s125, 1
        %s445 = smul.addr %s444, 8
        %s446 = scalar_lea.vmem [#allocation8], %s445
        %s447 = sand.u32 %s26, 1
        %s448 = scalar_lea.sflag [#allocation9], %s447
        %s449 = sand.u32 %s153, 1
        %s450 = smul.addr %s449, 8
        %s451 = scalar_lea.vmem [#allocation10], %s450
        // Predicated region
        $region37: #{tpu_custom_call.1} parent=27 // pred_check
          %p452 = pneg %p107
        $region38: #{tpu_custom_call.1} parent=27 // pred_check_branch
          %454 = sbr.rel (%p452) target = $region40
        $region39: #{tpu_custom_call.1} parent=27 // pred_region
          %s455 = smul.u32 2, %s31
          %s457 = ssub.s32 128, 128
          %458 = vsyncadd %s438, %s457
          %s459 = smul.addr %s30, 4
          %s460 = sadd.s32 %s455, %s459
          %s461 = smul.addr %s460, 64
          %s462 = scalar_lea.hbm %s2, %s461
          %s463 = sshll.u32 %s441, 4
          %s464 = int_to_ptr.vmem [resolvable:$true] %s463
          %469 = dma.vmem_to_hbm [thread:$0]  %s464, 128, %s462, %s438, 64, 64, 4
        $region40: #{tpu_custom_call.1} parent=27 // pred_fallthru
          _
        // Predicated region
        $region41: #{tpu_custom_call.1} parent=27 // pred_check
          %p470 = pneg %p135
        $region42: #{tpu_custom_call.1} parent=27 // pred_check_branch
          %472 = sbr.rel (%p470) target = $region44
        $region43: #{tpu_custom_call.1} parent=27 // pred_region
          %s473 = smul.u32 2, %s31
          %s475 = ssub.s32 128, 128
          %476 = vsyncadd %s443, %s475
          %s477 = smul.addr %s30, 4
          %s478 = sadd.s32 %s473, %s477
          %s479 = smul.addr %s478, 64
          %s480 = scalar_lea.hbm %s3, %s479
          %s481 = sshll.u32 %s446, 4
          %s482 = int_to_ptr.vmem [resolvable:$true] %s481
          %487 = dma.vmem_to_hbm [thread:$0]  %s482, 128, %s480, %s443, 64, 64, 4
        $region44: #{tpu_custom_call.1} parent=27 // pred_fallthru
          _
        // Predicated region
        $region45: #{tpu_custom_call.1} parent=27 // pred_check
          %p488 = pneg %p163
        $region46: #{tpu_custom_call.1} parent=27 // pred_check_branch
          %490 = sbr.rel (%p488) target = $region48
        $region47: #{tpu_custom_call.1} parent=27 // pred_region
          %s491 = smul.u32 2, %s31
          %s493 = ssub.s32 128, 128
          %494 = vsyncadd %s448, %s493
          %s495 = smul.addr %s30, 4
          %s496 = sadd.s32 %s491, %s495
          %s497 = smul.addr %s496, 64
          %s498 = scalar_lea.hbm %s4, %s497
          %s499 = sshll.u32 %s451, 4
          %s500 = int_to_ptr.vmem [resolvable:$true] %s499
          %505 = dma.vmem_to_hbm [thread:$0]  %s500, 128, %s498, %s448, 64, 64, 4
        $region48: #{tpu_custom_call.1} parent=27 // pred_fallthru
          _
      $region28: #{tpu_custom_call.1} parent=5 // pred_fallthru
        _
      %p506 = scmp.le.s32.totalorder 2, %s21
      // Predicated region
      $region49: #{tpu_custom_call.1} parent=5 // pred_check
        %p507 = pneg %p506
      $region50: #{tpu_custom_call.1} parent=5 // pred_check_branch
        %509 = sbr.rel (%p507) target = $region52
      $region51: #{tpu_custom_call.1} parent=5 // pred_region
        %s510 = ssub.s32 %s21, 2
        // Predicated region
        $region53: #{tpu_custom_call.1} parent=51 // pred_check
          %p511 = pneg %p113
        $region54: #{tpu_custom_call.1} parent=51 // pred_check_branch
          %513 = sbr.rel (%p511) target = $region56
        $region55: #{tpu_custom_call.1} parent=51 // pred_region
          %s514 = sand.u32 %s98, 1
          %s515 = scalar_lea.sflag [#allocation4], %s514
          %s516 = sand.u32 %s98, 1
          %s517 = smul.addr %s516, 8
          %s518 = scalar_lea.vmem [#allocation7], %s517
          %519 = dma.done %s515, 128
        $region56: #{tpu_custom_call.1} parent=51 // pred_fallthru
          _
        // Predicated region
        $region57: #{tpu_custom_call.1} parent=51 // pred_check
          %p520 = pneg %p141
        $region58: #{tpu_custom_call.1} parent=51 // pred_check_branch
          %522 = sbr.rel (%p520) target = $region60
        $region59: #{tpu_custom_call.1} parent=51 // pred_region
          %s523 = sand.u32 %s27, 1
          %s524 = scalar_lea.sflag [#allocation9], %s523
          %s525 = sand.u32 %s126, 1
          %s526 = smul.addr %s525, 8
          %s527 = scalar_lea.vmem [#allocation8], %s526
          %528 = dma.done %s524, 128
        $region60: #{tpu_custom_call.1} parent=51 // pred_fallthru
          _
        // Predicated region
        $region61: #{tpu_custom_call.1} parent=51 // pred_check
          %p529 = pneg %p169
        $region62: #{tpu_custom_call.1} parent=51 // pred_check_branch
          %531 = sbr.rel (%p529) target = $region64
        $region63: #{tpu_custom_call.1} parent=51 // pred_region
          %s532 = sand.u32 %s27, 1
          %s533 = scalar_lea.sflag [#allocation9], %s532
          %s534 = sand.u32 %s154, 1
          %s535 = smul.addr %s534, 8
          %s536 = scalar_lea.vmem [#allocation10], %s535
          %537 = dma.done %s533, 128
        $region64: #{tpu_custom_call.1} parent=51 // pred_fallthru
          _
      $region52: #{tpu_custom_call.1} parent=5 // pred_fallthru
        _
    $region6: #{tpu_custom_call.1} parent=1 // loop_footer
      %s25 = sadd.s32 1, %s21
    $region7: #{tpu_custom_call.1} parent=1 // loop_footer_branch
      %20 = sbr.rel target = $region3
    $region8: #{tpu_custom_call.1} parent=1 // loop_exit
      _
    %538 = vsyncpa [#allocation3], 1
    %s539 = scalar_lea.sflag [#allocation3], 1
    %540 = vsyncpa %s539, 1
    %541 = vsyncpa [#allocation6], 1
    %542 = vsyncpa [#allocation4], 1
    %s543 = scalar_lea.sflag [#allocation4], 1
    %544 = vsyncpa %s543, 1
    %545 = vsyncpa [#allocation9], 1
    %s546 = scalar_lea.sflag [#allocation9], 1
    %547 = vsyncpa %s546, 1

</llo_original>
